<compile_context>
chip_gen: v7x
topology: tpu7x:2x2x1
jax: 0.10.0
libtpu: 0.0.40
codegen_flags: <defaults>
</compile_context>

<pallas_src>
import jax
import jax.numpy as jnp
from jax.experimental import pallas as pl
from jax.experimental.pallas import tpu as pltpu


def dueling_q_kernel(x_ref, w1_ref, b1_ref, w2_ref, b2_ref, wq_ref, bq_ref,
                     q_ref):
    # fc1 + relu (bf16 matmul inputs, f32 accumulate / epilogue)
    x = x_ref[...].astype(jnp.bfloat16)
    h1 = jnp.dot(x, w1_ref[...], preferred_element_type=jnp.float32)
    h1 = jnp.maximum(h1 + b1_ref[...], 0.0)
    # dropout = identity (eval mode)

    # fc2 + relu
    h2 = jnp.dot(h1.astype(jnp.bfloat16), w2_ref[...],
                 preferred_element_type=jnp.float32)
    h2 = jnp.maximum(h2 + b2_ref[...], 0.0)
    # dropout = identity (eval mode)

    # Head matmul produces q directly (dueling mean pre-folded into wq/bq);
    # epilogue is just a bias add.
    q = jnp.dot(h2.astype(jnp.bfloat16), wq_ref[...],
                preferred_element_type=jnp.float32)
    q_ref[...] = (q + bq_ref[...]).astype(q_ref.dtype)


def _round_up(n, m):
    return ((n + m - 1) // m) * m


def dueling_q_forward(x, params, tb=512):
    """x: (B, state_size) float (f32 or bf16); params from init_params."""
    B, S = x.shape
    F1 = params["w1"].shape[1]
    F2 = params["w2"].shape[1]
    A = params["wq"].shape[1]

    # MXU-row-aligned batch tile.  Clamp for tiny batches so we don't inflate
    # to a full 512-row tile, and keep >= 2 grid steps when the batch allows
    # it so the "parallel" axis can shard across v7x's two TensorCores.
    tb = min(tb, _round_up(B, 128))
    if pl.cdiv(B, tb) == 1 and B > 128:
        tb = _round_up(pl.cdiv(B, 2), 128)
    nb = pl.cdiv(B, tb)

    weight_bytes = sum(int(p.size) * p.dtype.itemsize for p in params.values())
    cost = pl.CostEstimate(
        flops=2 * B * (S * F1 + F1 * F2 + F2 * A),
        transcendentals=0,
        bytes_accessed=int(x.size) * x.dtype.itemsize
        + B * A * 4
        + weight_bytes,
    )

    # Constant index_map -> weights/biases stay VMEM-resident across the grid.
    const = lambda a: pl.BlockSpec(a.shape, lambda i: (0, 0))

    q = pl.pallas_call(
        dueling_q_kernel,
        out_shape=jax.ShapeDtypeStruct((B, A), jnp.float32),
        grid_spec=pl.GridSpec(
            grid=(nb,),
            in_specs=[
                pl.BlockSpec((tb, S), lambda i: (i, 0)),   # x: batch-tiled
                const(params["w1"]), const(params["b1"]),
                const(params["w2"]), const(params["b2"]),
                const(params["wq"]), const(params["bq"]),
            ],
            out_specs=pl.BlockSpec((tb, A), lambda i: (i, 0)),
        ),
        compiler_params=pltpu.CompilerParams(
            dimension_semantics=("parallel",),
        ),
        cost_estimate=cost,
    )(x, params["w1"], params["b1"], params["w2"], params["b2"],
      params["wq"], params["bq"])

    return q


def init_params(key, state_size, action_size, fc1_units=128, fc2_units=128):
    """PyTorch-Linear-style init: U(-1/sqrt(fan_in), 1/sqrt(fan_in)).
    Weights stored transposed (in_features, out_features).  The dueling
    aggregation is folded into the head weights in f32, then cast to bf16
    once.  Returns (kernel_params, f32_reference_params)."""
    ks = jax.random.split(key, 8)

    def lin(kw, kb, fan_in, fan_out):
        bound = float(fan_in) ** -0.5
        w = jax.random.uniform(kw, (fan_in, fan_out), jnp.float32, -bound, bound)
        b = jax.random.uniform(kb, (1, fan_out), jnp.float32, -bound, bound)
        return w, b

    w1, b1 = lin(ks[0], ks[1], state_size, fc1_units)
    w2, b2 = lin(ks[2], ks[3], fc1_units, fc2_units)
    wv, bv = lin(ks[4], ks[5], fc2_units, 1)
    wa, ba = lin(ks[6], ks[7], fc2_units, action_size)

    # q = V + (A - mean_a A)  ==>  fold into one (fc2, A) head (computed in f32).
    wq = wv + (wa - wa.mean(axis=1, keepdims=True))     # (fc2, A)
    bq = bv + (ba - ba.mean(axis=1, keepdims=True))     # (1, A)

    params = {
        "w1": w1.astype(jnp.bfloat16), "b1": b1,
        "w2": w2.astype(jnp.bfloat16), "b2": b2,
        "wq": wq.astype(jnp.bfloat16), "bq": bq,
    }
    ref_params = {"w1": w1, "b1": b1, "w2": w2, "b2": b2,
                  "wv": wv, "bv": bv, "wa": wa, "ba": ba}
    return params, ref_params


def reference_forward(x, p):
    """Pure-f32 reference with the original (unfolded) dueling aggregation --
    matches the PyTorch module's eval-mode forward."""
    h1 = jnp.maximum(x @ p["w1"] + p["b1"], 0.0)
    h2 = jnp.maximum(h1 @ p["w2"] + p["b2"], 0.0)
    value = h2 @ p["wv"] + p["bv"]
    adv = h2 @ p["wa"] + p["ba"]
    return value + (adv - adv.mean(axis=1, keepdims=True))


if __name__ == "__main__":
    key = jax.random.PRNGKey(0)
    k_x, k_p = jax.random.split(key)

    batch, state_size, action_size = 8, 8, 4
    x = jax.random.normal(k_x, (batch, state_size), jnp.float32)
    params, ref_params = init_params(k_p, state_size, action_size)

    q = jax.block_until_ready(dueling_q_forward(x, params))
    q_ref = reference_forward(x, ref_params)

    assert q.shape == (batch, action_size)
    assert jnp.allclose(q, q_ref, atol=2e-2, rtol=2e-2), "mismatch vs reference"

    print("KERNEL_OK")
</pallas_src>

<mosaic_0001>
module attributes {stable_mosaic.version = 11 : i64} {
  func.func @dueling_q_kernel(%arg0: i32, %arg1: memref<128x8xf32, #tpu.memory_space<vmem>>, %arg2: memref<8x128xbf16, #tpu.memory_space<vmem>>, %arg3: memref<1x128xf32, #tpu.memory_space<vmem>>, %arg4: memref<128x128xbf16, #tpu.memory_space<vmem>>, %arg5: memref<1x128xf32, #tpu.memory_space<vmem>>, %arg6: memref<128x4xbf16, #tpu.memory_space<vmem>>, %arg7: memref<1x4xf32, #tpu.memory_space<vmem>>, %arg8: memref<128x4xf32, #tpu.memory_space<vmem>>) attributes {dimension_semantics = [#tpu.dimension_semantics<parallel>], iteration_bounds = array<i64: 1>, scalar_prefetch = 0 : i64, scratch_operands = 0 : i64, tpu.core_type = #tpu.core_type<tc>, window_params = [{transform_indices = @transform_0, window_bounds = array<i64: 128, 8>}, {pipeline_mode = #tpu.pipeline_mode<synchronous>, transform_indices = @transform_1, window_bounds = array<i64: 8, 128>}, {pipeline_mode = #tpu.pipeline_mode<synchronous>, transform_indices = @transform_2, window_bounds = array<i64: 1, 128>}, {pipeline_mode = #tpu.pipeline_mode<synchronous>, transform_indices = @transform_3, window_bounds = array<i64: 128, 128>}, {pipeline_mode = #tpu.pipeline_mode<synchronous>, transform_indices = @transform_4, window_bounds = array<i64: 1, 128>}, {pipeline_mode = #tpu.pipeline_mode<synchronous>, transform_indices = @transform_5, window_bounds = array<i64: 128, 4>}, {pipeline_mode = #tpu.pipeline_mode<synchronous>, transform_indices = @transform_6, window_bounds = array<i64: 1, 4>}, {transform_indices = @transform_7, window_bounds = array<i64: 128, 4>}]} {
    %c0 = arith.constant 0 : index
    %c0_0 = arith.constant 0 : index
    %0 = vector.load %arg1[%c0, %c0_0] : memref<128x8xf32, #tpu.memory_space<vmem>>, vector<128x8xf32>
    %1 = arith.truncf %0 : vector<128x8xf32> to vector<128x8xbf16>
    %c0_1 = arith.constant 0 : index
    %c0_2 = arith.constant 0 : index
    %2 = vector.load %arg2[%c0_1, %c0_2] : memref<8x128xbf16, #tpu.memory_space<vmem>>, vector<8x128xbf16>
    %cst = arith.constant dense<0.000000e+00> : vector<128x128xf32>
    %3 = tpu.matmul %1, %2, %cst {dimension_numbers = #tpu.dot_dimension_numbers<[1], [0], [0], [1], [0, 0, 1, 1], [], []>} : vector<128x8xbf16>, vector<8x128xbf16>, vector<128x128xf32> -> vector<128x128xf32>
    %c0_3 = arith.constant 0 : index
    %c0_4 = arith.constant 0 : index
    %4 = vector.load %arg3[%c0_3, %c0_4] : memref<1x128xf32, #tpu.memory_space<vmem>>, vector<1x128xf32>
    %5 = vector.broadcast %4 : vector<1x128xf32> to vector<128x128xf32>
    %6 = arith.addf %3, %5 : vector<128x128xf32>
    %cst_5 = arith.constant 0.000000e+00 : f32
    %7 = vector.broadcast %cst_5 : f32 to vector<128x128xf32>
    %8 = arith.maximumf %6, %7 : vector<128x128xf32>
    %9 = arith.truncf %8 : vector<128x128xf32> to vector<128x128xbf16>
    %c0_6 = arith.constant 0 : index
    %c0_7 = arith.constant 0 : index
    %10 = vector.load %arg4[%c0_6, %c0_7] : memref<128x128xbf16, #tpu.memory_space<vmem>>, vector<128x128xbf16>
    %cst_8 = arith.constant dense<0.000000e+00> : vector<128x128xf32>
    %11 = tpu.matmul %9, %10, %cst_8 {dimension_numbers = #tpu.dot_dimension_numbers<[1], [0], [0], [1], [0, 0, 1, 1], [], []>} : vector<128x128xbf16>, vector<128x128xbf16>, vector<128x128xf32> -> vector<128x128xf32>
    %c0_9 = arith.constant 0 : index
    %c0_10 = arith.constant 0 : index
    %12 = vector.load %arg5[%c0_9, %c0_10] : memref<1x128xf32, #tpu.memory_space<vmem>>, vector<1x128xf32>
    %13 = vector.broadcast %12 : vector<1x128xf32> to vector<128x128xf32>
    %14 = arith.addf %11, %13 : vector<128x128xf32>
    %cst_11 = arith.constant 0.000000e+00 : f32
    %15 = vector.broadcast %cst_11 : f32 to vector<128x128xf32>
    %16 = arith.maximumf %14, %15 : vector<128x128xf32>
    %17 = arith.truncf %16 : vector<128x128xf32> to vector<128x128xbf16>
    %c0_12 = arith.constant 0 : index
    %c0_13 = arith.constant 0 : index
    %18 = vector.load %arg6[%c0_12, %c0_13] : memref<128x4xbf16, #tpu.memory_space<vmem>>, vector<128x4xbf16>
    %cst_14 = arith.constant dense<0.000000e+00> : vector<128x4xf32>
    %19 = tpu.matmul %17, %18, %cst_14 {dimension_numbers = #tpu.dot_dimension_numbers<[1], [0], [0], [1], [0, 0, 1, 1], [], []>} : vector<128x128xbf16>, vector<128x4xbf16>, vector<128x4xf32> -> vector<128x4xf32>
    %c0_15 = arith.constant 0 : index
    %c0_16 = arith.constant 0 : index
    %20 = vector.load %arg7[%c0_15, %c0_16] : memref<1x4xf32, #tpu.memory_space<vmem>>, vector<1x4xf32>
    %21 = vector.broadcast %20 : vector<1x4xf32> to vector<128x4xf32>
    %22 = arith.addf %19, %21 : vector<128x4xf32>
    %c0_17 = arith.constant 0 : index
    %c0_18 = arith.constant 0 : index
    %23 = vector.load %arg8[%c0_17, %c0_18] : memref<128x4xf32, #tpu.memory_space<vmem>>, vector<128x4xf32>
    tpu.vector_store %arg8[%c0_17, %c0_18], %22 {strides = array<i32>} : memref<128x4xf32, #tpu.memory_space<vmem>>, vector<128x4xf32>,
    return
  }
  func.func @transform_0(%arg0: i32) -> (i32, i32) {
    %c0_i32 = arith.constant 0 : i32
    %c0_i32_0 = arith.constant 0 : i32
    return %arg0, %c0_i32 : i32, i32
  }
  func.func @transform_1(%arg0: i32) -> (i32, i32) {
    %c0_i32 = arith.constant 0 : i32
    %c0_i32_0 = arith.constant 0 : i32
    %c0_i32_1 = arith.constant 0 : i32
    return %c0_i32, %c0_i32_0 : i32, i32
  }
  func.func @transform_2(%arg0: i32) -> (i32, i32) {
    %c0_i32 = arith.constant 0 : i32
    %c0_i32_0 = arith.constant 0 : i32
    %c0_i32_1 = arith.constant 0 : i32
    return %c0_i32, %c0_i32_0 : i32, i32
  }
  func.func @transform_3(%arg0: i32) -> (i32, i32) {
    %c0_i32 = arith.constant 0 : i32
    %c0_i32_0 = arith.constant 0 : i32
    %c0_i32_1 = arith.constant 0 : i32
    return %c0_i32, %c0_i32_0 : i32, i32
  }
  func.func @transform_4(%arg0: i32) -> (i32, i32) {
    %c0_i32 = arith.constant 0 : i32
    %c0_i32_0 = arith.constant 0 : i32
    %c0_i32_1 = arith.constant 0 : i32
    return %c0_i32, %c0_i32_0 : i32, i32
  }
  func.func @transform_5(%arg0: i32) -> (i32, i32) {
    %c0_i32 = arith.constant 0 : i32
    %c0_i32_0 = arith.constant 0 : i32
    %c0_i32_1 = arith.constant 0 : i32
    return %c0_i32, %c0_i32_0 : i32, i32
  }
  func.func @transform_6(%arg0: i32) -> (i32, i32) {
    %c0_i32 = arith.constant 0 : i32
    %c0_i32_0 = arith.constant 0 : i32
    %c0_i32_1 = arith.constant 0 : i32
    return %c0_i32, %c0_i32_0 : i32, i32
  }
  func.func @transform_7(%arg0: i32) -> (i32, i32) {
    %c0_i32 = arith.constant 0 : i32
    %c0_i32_0 = arith.constant 0 : i32
    return %arg0, %c0_i32 : i32, i32
  }
}

</mosaic_0001>

<llo_original>
// kernel: tpu_custom_call.1
$region0: #{tpu_custom_call.1}
  #allocation0 [shape = 'u32[]', space=smem, size = 0x4, offset = 0x4, fixed_abs, tag = 'smem constant byte address 0x4 - core index']
  #allocation1 [shape = 'u32[144,128]{1,0:T(1,128)}', space=vmem, size = 0x12000, scoped, tag = 'internal scratch']
  %s0 = inlined_call_operand.vmem [shape: f32[8,8], index: 0, kind: input, shape index: {}]
  %s1 = inlined_call_operand.vmem [shape: bf16[8,128], index: 1, kind: input, shape index: {}]
  %s2 = inlined_call_operand.vmem [shape: f32[1,128], index: 2, kind: input, shape index: {}]
  %s3 = inlined_call_operand.vmem [shape: bf16[128,128], index: 3, kind: input, shape index: {}]
  %s4 = inlined_call_operand.vmem [shape: f32[1,128], index: 4, kind: input, shape index: {}]
  %s5 = inlined_call_operand.vmem [shape: bf16[128,4], index: 5, kind: input, shape index: {}]
  %s6 = inlined_call_operand.vmem [shape: f32[1,4], index: 6, kind: input, shape index: {}]
  %s7 = inlined_call_operand.vmem [shape: f32[8,4], index: 7, kind: output, shape index: {}]
  %s8 = sld [smem:[#allocation0]]
  $region72: #{tpu_custom_call.1} parent=0
    _
  %s10 = ssub.s32 1, %s8
  %s11 = scalar_select 0, %s10, %s8
  $region1: #{tpu_custom_call.1} parent=0
    #allocation2 [shape = 'u8[65536]{0}', space=vmem, size = 0x10000, scoped, tag = 'output window, operand 0, single buffered']
    // Predicated region
    $region2: #{tpu_custom_call.1} parent=1 // pred_check
      _
    $region3: #{tpu_custom_call.1} parent=1 // pred_check_branch
      %13 = sbr.rel (0) target = $region5
    $region4: #{tpu_custom_call.1} parent=1 // pred_region
      _
    $region5: #{tpu_custom_call.1} parent=1 // pred_fallthru
      _
    // Predicated region
    $region6: #{tpu_custom_call.1} parent=1 // pred_check
      _
    $region7: #{tpu_custom_call.1} parent=1 // pred_check_branch
      %15 = sbr.rel (0) target = $region9
    $region8: #{tpu_custom_call.1} parent=1 // pred_region
      _
    $region9: #{tpu_custom_call.1} parent=1 // pred_fallthru
      _
    // Predicated region
    $region10: #{tpu_custom_call.1} parent=1 // pred_check
      _
    $region11: #{tpu_custom_call.1} parent=1 // pred_check_branch
      %17 = sbr.rel (0) target = $region13
    $region12: #{tpu_custom_call.1} parent=1 // pred_region
      _
    $region13: #{tpu_custom_call.1} parent=1 // pred_fallthru
      _
    // Predicated region
    $region14: #{tpu_custom_call.1} parent=1 // pred_check
      _
    $region15: #{tpu_custom_call.1} parent=1 // pred_check_branch
      %19 = sbr.rel (0) target = $region17
    $region16: #{tpu_custom_call.1} parent=1 // pred_region
      _
    $region17: #{tpu_custom_call.1} parent=1 // pred_fallthru
      _
    // Predicated region
    $region18: #{tpu_custom_call.1} parent=1 // pred_check
      _
    $region19: #{tpu_custom_call.1} parent=1 // pred_check_branch
      %21 = sbr.rel (0) target = $region21
    $region20: #{tpu_custom_call.1} parent=1 // pred_region
      _
    $region21: #{tpu_custom_call.1} parent=1 // pred_fallthru
      _
    // Predicated region
    $region22: #{tpu_custom_call.1} parent=1 // pred_check
      _
    $region23: #{tpu_custom_call.1} parent=1 // pred_check_branch
      %23 = sbr.rel (0) target = $region25
    $region24: #{tpu_custom_call.1} parent=1 // pred_region
      _
    $region25: #{tpu_custom_call.1} parent=1 // pred_fallthru
      _
    // Predicated region
    $region26: #{tpu_custom_call.1} parent=1 // pred_check
      _
    $region27: #{tpu_custom_call.1} parent=1 // pred_check_branch
      %25 = sbr.rel (0) target = $region29
    $region28: #{tpu_custom_call.1} parent=1 // pred_region
      _
    $region29: #{tpu_custom_call.1} parent=1 // pred_fallthru
      _
    %v27 = vld [vmem:[%s0] sm:$0xff]
    %v28 = vld [vmem:[%s0 + $0x8] sm:$0xff]
    %v29 = vld [vmem:[%s0 + $0x10] sm:$0xff]
    %v30 = vld [vmem:[%s0 + $0x18] sm:$0xff]
    %v31 = vld [vmem:[%s0 + $0x20] sm:$0xff]
    %v32 = vld [vmem:[%s0 + $0x28] sm:$0xff]
    %v33 = vld [vmem:[%s0 + $0x30] sm:$0xff]
    %v34 = vld [vmem:[%s0 + $0x38] sm:$0xff]
    %v35 = vld [vmem:[%s0 + $0x40] sm:$0xff]
    %v36 = vld [vmem:[%s0 + $0x48] sm:$0xff]
    %v37 = vld [vmem:[%s0 + $0x50] sm:$0xff]
    %v38 = vld [vmem:[%s0 + $0x58] sm:$0xff]
    %v39 = vld [vmem:[%s0 + $0x60] sm:$0xff]
    %v40 = vld [vmem:[%s0 + $0x68] sm:$0xff]
    %v41 = vld [vmem:[%s0 + $0x70] sm:$0xff]
    %v42 = vld [vmem:[%s0 + $0x78] sm:$0xff]
    %v43 = vpack.c.bf16 %v28, %v27
    %v44 = vpack.c.bf16 %v30, %v29
    %v45 = vpack.c.bf16 %v32, %v31
    %v46 = vpack.c.bf16 %v34, %v33
    %v47 = vpack.c.bf16 %v36, %v35
    %v48 = vpack.c.bf16 %v38, %v37
    %v49 = vpack.c.bf16 %v40, %v39
    %v50 = vpack.c.bf16 %v42, %v41
    %v51 = vld [vmem:[%s1] sm:$0xf]
    %v52 = vld [vmem:[%s2] sm:$0x1]
    %v54 = vlaneseq
    %v55 = vshrl.u32 %v54, 7
    %v56 = vsub.s32 0, %v55
    %v57 = vrot.slane %v52, %v56
    %vm59 = vcmask 64512
    %v61 = vsel %vm59, %v43, 0
    %v64 = vsel %vm59, %v44, 0
    %v67 = vsel %vm59, %v45, 0
    %v70 = vsel %vm59, %v46, 0
    %v73 = vsel %vm59, %v47, 0
    %v76 = vsel %vm59, %v48, 0
    %v79 = vsel %vm59, %v49, 0
    %v82 = vsel %vm59, %v50, 0
    %vm84 = vcmask 1043456
    %v86 = vsel %vm84, %v51, 0
    %88 = vmatprep.subr.bf16.mxu0 0
    %89 = vmatpush1.bf16.msra.mxu0 %v86
    %90 = vmatprep.subr.bf16.mxu0 0
    %91 = vmatpush1.bf16.msra.mxu0 0
    %92 = vmatprep.subr.bf16.mxu0 0
    %93 = vmatpush1.bf16.msra.mxu0 0
    %94 = vmatprep.subr.bf16.mxu0 0
    %95 = vmatpush1.bf16.msra.mxu0 0
    %96 = vmatprep.subr.bf16.mxu0 0
    %97 = vmatpush1.bf16.msra.mxu0 0
    %98 = vmatprep.subr.bf16.mxu0 0
    %99 = vmatpush1.bf16.msra.mxu0 0
    %100 = vmatprep.subr.bf16.mxu0 0
    %101 = vmatpush1.bf16.msra.mxu0 0
    %102 = vmatprep.subr.bf16.mxu0 0
    %103 = vmatpush1.bf16.msra.mxu0 0
    %104 = vmatprep.subr.bf16.mxu0 0
    %105 = vmatpush1.bf16.msra.mxu0 0
    %106 = vmatprep.subr.bf16.mxu0 0
    %107 = vmatpush1.bf16.msra.mxu0 0
    %108 = vmatprep.subr.bf16.mxu0 0
    %109 = vmatpush1.bf16.msra.mxu0 0
    %110 = vmatprep.subr.bf16.mxu0 0
    %111 = vmatpush1.bf16.msra.mxu0 0
    %112 = vmatprep.subr.bf16.mxu0 0
    %113 = vmatpush1.bf16.msra.mxu0 0
    %114 = vmatprep.subr.bf16.mxu0 0
    %115 = vmatpush1.bf16.msra.mxu0 0
    %116 = vmatprep.subr.bf16.mxu0 0
    %117 = vmatpush1.bf16.msra.mxu0 0
    %118 = vmatprep.subr.bf16.mxu0 0
    %119 = vmatpush1.bf16.msra.mxu0 0
    %120 = vmatprep.mubr.bf16.mxu0 0
    %121 = vmatmul.mubr.bf16.gmra.mrb[0].mxu0 %v61
    %v122 = vpop.f32.mrb[0].mxu0
    %v123 = vadd.f32 %v57, %v122
    %v124 = vpop.f32.mrb[0].mxu0
    %v125 = vpop.f32.mrb[0].mxu0
    %v126 = vadd.f32 %v57, %v125
    %v127 = vpop.f32.mrb[0].mxu0
    %128 = vmatprep.mubr.bf16.mxu0 0
    %129 = vmatmul.mubr.bf16.gmra.mrb[0].mxu0 %v64
    %v130 = vpop.f32.mrb[0].mxu0
    %v131 = vadd.f32 %v57, %v130
    %v132 = vpop.f32.mrb[0].mxu0
    %v133 = vpop.f32.mrb[0].mxu0
    %v134 = vadd.f32 %v57, %v133
    %v135 = vpop.f32.mrb[0].mxu0
    %136 = vmatprep.mubr.bf16.mxu0 0
    %137 = vmatmul.mubr.bf16.gmra.mrb[0].mxu0 %v67
    %v138 = vpop.f32.mrb[0].mxu0
    %v139 = vadd.f32 %v57, %v138
    %v140 = vpop.f32.mrb[0].mxu0
    %v141 = vpop.f32.mrb[0].mxu0
    %v142 = vadd.f32 %v57, %v141
    %v143 = vpop.f32.mrb[0].mxu0
    %144 = vmatprep.mubr.bf16.mxu0 0
    %145 = vmatmul.mubr.bf16.gmra.mrb[0].mxu0 %v70
    %v146 = vpop.f32.mrb[0].mxu0
    %v147 = vadd.f32 %v57, %v146
    %v148 = vpop.f32.mrb[0].mxu0
    %v149 = vpop.f32.mrb[0].mxu0
    %v150 = vadd.f32 %v57, %v149
    %v151 = vpop.f32.mrb[0].mxu0
    %152 = vmatprep.mubr.bf16.mxu0 0
    %153 = vmatmul.mubr.bf16.gmra.mrb[0].mxu0 %v73
    %v154 = vpop.f32.mrb[0].mxu0
    %v155 = vadd.f32 %v57, %v154
    %v156 = vpop.f32.mrb[0].mxu0
    %v157 = vpop.f32.mrb[0].mxu0
    %v158 = vadd.f32 %v57, %v157
    %v159 = vpop.f32.mrb[0].mxu0
    %160 = vmatprep.mubr.bf16.mxu0 0
    %161 = vmatmul.mubr.bf16.gmra.mrb[0].mxu0 %v76
    %v162 = vpop.f32.mrb[0].mxu0
    %v163 = vadd.f32 %v57, %v162
    %v164 = vpop.f32.mrb[0].mxu0
    %v165 = vpop.f32.mrb[0].mxu0
    %v166 = vadd.f32 %v57, %v165
    %v167 = vpop.f32.mrb[0].mxu0
    %168 = vmatprep.mubr.bf16.mxu0 0
    %169 = vmatmul.mubr.bf16.gmra.mrb[0].mxu0 %v79
    %v170 = vpop.f32.mrb[0].mxu0
    %v171 = vadd.f32 %v57, %v170
    %v172 = vpop.f32.mrb[0].mxu0
    %v173 = vpop.f32.mrb[0].mxu0
    %v174 = vadd.f32 %v57, %v173
    %v175 = vpop.f32.mrb[0].mxu0
    %176 = vmatprep.mubr.bf16.mxu0 0
    %177 = vmatmul.mubr.bf16.gmra.mrb[0].mxu0 %v82
    %v178 = vpop.f32.mrb[0].mxu0
    %v179 = vadd.f32 %v57, %v178
    %v180 = vpop.f32.mrb[0].mxu0
    %v181 = vpop.f32.mrb[0].mxu0
    %v182 = vadd.f32 %v57, %v181
    %v183 = vpop.f32.mrb[0].mxu0
    %184 = vdwg.mxu0
    %v185 = vmax.f32 %v123, 0.0
    %v186 = vmax.f32 %v126, 0.0
    %v187 = vmax.f32 %v131, 0.0
    %v188 = vmax.f32 %v134, 0.0
    %v189 = vmax.f32 %v139, 0.0
    %v190 = vmax.f32 %v142, 0.0
    %v191 = vmax.f32 %v147, 0.0
    %v192 = vmax.f32 %v150, 0.0
    %v193 = vmax.f32 %v155, 0.0
    %v194 = vmax.f32 %v158, 0.0
    %v195 = vmax.f32 %v163, 0.0
    %v196 = vmax.f32 %v166, 0.0
    %v197 = vmax.f32 %v171, 0.0
    %v198 = vmax.f32 %v174, 0.0
    %v199 = vmax.f32 %v179, 0.0
    %v200 = vmax.f32 %v182, 0.0
    %v201 = vpack.c.bf16 %v186, %v185
    %v202 = vpack.c.bf16 %v188, %v187
    %v203 = vpack.c.bf16 %v190, %v189
    %v204 = vpack.c.bf16 %v192, %v191
    %v205 = vpack.c.bf16 %v194, %v193
    %v206 = vpack.c.bf16 %v196, %v195
    %v207 = vpack.c.bf16 %v198, %v197
    %v208 = vpack.c.bf16 %v200, %v199
    %v209 = vld [vmem:[%s3] sm:$0xf]
    %v210 = vld [vmem:[%s3 + $0x4] sm:$0xf]
    %v211 = vld [vmem:[%s3 + $0x8] sm:$0xf]
    %v212 = vld [vmem:[%s3 + $0xc] sm:$0xf]
    %v213 = vld [vmem:[%s3 + $0x10] sm:$0xf]
    %v214 = vld [vmem:[%s3 + $0x14] sm:$0xf]
    %v215 = vld [vmem:[%s3 + $0x18] sm:$0xf]
    %v216 = vld [vmem:[%s3 + $0x1c] sm:$0xf]
    %v217 = vld [vmem:[%s3 + $0x20] sm:$0xf]
    %v218 = vld [vmem:[%s3 + $0x24] sm:$0xf]
    %v219 = vld [vmem:[%s3 + $0x28] sm:$0xf]
    %v220 = vld [vmem:[%s3 + $0x2c] sm:$0xf]
    %v221 = vld [vmem:[%s3 + $0x30] sm:$0xf]
    %v222 = vld [vmem:[%s3 + $0x34] sm:$0xf]
    %v223 = vld [vmem:[%s3 + $0x38] sm:$0xf]
    %v224 = vld [vmem:[%s3 + $0x3c] sm:$0xf]
    %v225 = vld [vmem:[%s4] sm:$0x1]
    %v227 = vlaneseq
    %v228 = vshrl.u32 %v227, 7
    %v229 = vsub.s32 0, %v228
    %v230 = vrot.slane %v225, %v229
    %v248 = vunpack.c.l.b16 %v209
    %v249 = vunpack.c.l.b16 %v210
    %v250 = vunpack.c.l.b16 %v211
    %v251 = vunpack.c.l.b16 %v212
    %v252 = vunpack.c.l.b16 %v213
    %v253 = vunpack.c.l.b16 %v214
    %v254 = vunpack.c.l.b16 %v215
    %v255 = vunpack.c.l.b16 %v216
    %v256 = vunpack.c.l.b16 %v217
    %v257 = vunpack.c.l.b16 %v218
    %v258 = vunpack.c.l.b16 %v219
    %v259 = vunpack.c.l.b16 %v220
    %v260 = vunpack.c.l.b16 %v221
    %v261 = vunpack.c.l.b16 %v222
    %v262 = vunpack.c.l.b16 %v223
    %v263 = vunpack.c.l.b16 %v224
    %v264 = vpack.c.b16 %v249, %v248
    %v265 = vpack.c.b16 %v251, %v250
    %v266 = vpack.c.b16 %v253, %v252
    %v267 = vpack.c.b16 %v255, %v254
    %v268 = vpack.c.b16 %v257, %v256
    %v269 = vpack.c.b16 %v259, %v258
    %v270 = vpack.c.b16 %v261, %v260
    %v271 = vpack.c.b16 %v263, %v262
    %280 = vmatprep.subr.bf16.mxu0 0
    %281 = vmatpush1.bf16.msra.mxu0 %v264
    %282 = vmatprep.subr.bf16.mxu0 0
    %283 = vmatpush1.bf16.msra.mxu0 %v265
    %284 = vmatprep.subr.bf16.mxu0 0
    %285 = vmatpush1.bf16.msra.mxu0 %v266
    %286 = vmatprep.subr.bf16.mxu0 0
    %287 = vmatpush1.bf16.msra.mxu0 %v267
    %288 = vmatprep.subr.bf16.mxu0 0
    %289 = vmatpush1.bf16.msra.mxu0 %v268
    %290 = vmatprep.subr.bf16.mxu0 0
    %291 = vmatpush1.bf16.msra.mxu0 %v269
    %292 = vmatprep.subr.bf16.mxu0 0
    %293 = vmatpush1.bf16.msra.mxu0 %v270
    %294 = vmatprep.subr.bf16.mxu0 0
    %295 = vmatpush1.bf16.msra.mxu0 %v271
    %296 = vmatprep.subr.bf16.mxu0 0
    %297 = vmatpush1.bf16.msra.mxu0 0
    %298 = vmatprep.subr.bf16.mxu0 0
    %299 = vmatpush1.bf16.msra.mxu0 0
    %300 = vmatprep.subr.bf16.mxu0 0
    %301 = vmatpush1.bf16.msra.mxu0 0
    %302 = vmatprep.subr.bf16.mxu0 0
    %303 = vmatpush1.bf16.msra.mxu0 0
    %304 = vmatprep.subr.bf16.mxu0 0
    %305 = vmatpush1.bf16.msra.mxu0 0
    %306 = vmatprep.subr.bf16.mxu0 0
    %307 = vmatpush1.bf16.msra.mxu0 0
    %308 = vmatprep.subr.bf16.mxu0 0
    %309 = vmatpush1.bf16.msra.mxu0 0
    %310 = vmatprep.subr.bf16.mxu0 0
    %311 = vmatpush1.bf16.msra.mxu0 0
    %312 = vmatprep.mubr.bf16.mxu0 0
    %313 = vmatmul.mubr.bf16.gmra.mrb[0].mxu0 %v201
    %v314 = vpop.f32.mrb[0].mxu0
    %v315 = vadd.f32 %v230, %v314
    %v316 = vpop.f32.mrb[0].mxu0
    %v317 = vpop.f32.mrb[0].mxu0
    %v318 = vadd.f32 %v230, %v317
    %v319 = vpop.f32.mrb[0].mxu0
    %320 = vmatprep.mubr.bf16.mxu0 0
    %321 = vmatmul.mubr.bf16.gmra.mrb[0].mxu0 %v202
    %v322 = vpop.f32.mrb[0].mxu0
    %v323 = vadd.f32 %v230, %v322
    %v324 = vpop.f32.mrb[0].mxu0
    %v325 = vpop.f32.mrb[0].mxu0
    %v326 = vadd.f32 %v230, %v325
    %v327 = vpop.f32.mrb[0].mxu0
    %328 = vmatprep.mubr.bf16.mxu0 0
    %329 = vmatmul.mubr.bf16.gmra.mrb[0].mxu0 %v203
    %v330 = vpop.f32.mrb[0].mxu0
    %v331 = vadd.f32 %v230, %v330
    %v332 = vpop.f32.mrb[0].mxu0
    %v333 = vpop.f32.mrb[0].mxu0
    %v334 = vadd.f32 %v230, %v333
    %v335 = vpop.f32.mrb[0].mxu0
    %336 = vmatprep.mubr.bf16.mxu0 0
    %337 = vmatmul.mubr.bf16.gmra.mrb[0].mxu0 %v204
    %v338 = vpop.f32.mrb[0].mxu0
    %v339 = vadd.f32 %v230, %v338
    %v340 = vpop.f32.mrb[0].mxu0
    %v341 = vpop.f32.mrb[0].mxu0
    %v342 = vadd.f32 %v230, %v341
    %v343 = vpop.f32.mrb[0].mxu0
    %344 = vmatprep.mubr.bf16.mxu0 0
    %345 = vmatmul.mubr.bf16.gmra.mrb[0].mxu0 %v205
    %v346 = vpop.f32.mrb[0].mxu0
    %v347 = vadd.f32 %v230, %v346
    %v348 = vpop.f32.mrb[0].mxu0
    %v349 = vpop.f32.mrb[0].mxu0
    %v350 = vadd.f32 %v230, %v349
    %v351 = vpop.f32.mrb[0].mxu0
    %352 = vmatprep.mubr.bf16.mxu0 0
    %353 = vmatmul.mubr.bf16.gmra.mrb[0].mxu0 %v206
    %v354 = vpop.f32.mrb[0].mxu0
    %v355 = vadd.f32 %v230, %v354
    %v356 = vpop.f32.mrb[0].mxu0
    %v357 = vpop.f32.mrb[0].mxu0
    %v358 = vadd.f32 %v230, %v357
    %v359 = vpop.f32.mrb[0].mxu0
    %360 = vmatprep.mubr.bf16.mxu0 0
    %361 = vmatmul.mubr.bf16.gmra.mrb[0].mxu0 %v207
    %v362 = vpop.f32.mrb[0].mxu0
    %v363 = vadd.f32 %v230, %v362
    %v364 = vpop.f32.mrb[0].mxu0
    %v365 = vpop.f32.mrb[0].mxu0
    %v366 = vadd.f32 %v230, %v365
    %v367 = vpop.f32.mrb[0].mxu0
    %368 = vmatprep.mubr.bf16.mxu0 0
    %369 = vmatmul.mubr.bf16.gmra.mrb[0].mxu0 %v208
    %v370 = vpop.f32.mrb[0].mxu0
    %v371 = vadd.f32 %v230, %v370
    %v372 = vpop.f32.mrb[0].mxu0
    %v373 = vpop.f32.mrb[0].mxu0
    %v374 = vadd.f32 %v230, %v373
    %v375 = vpop.f32.mrb[0].mxu0
    %376 = vdwg.mxu0
    %v377 = vmax.f32 %v315, 0.0
    %v378 = vmax.f32 %v318, 0.0
    %v379 = vmax.f32 %v323, 0.0
    %v380 = vmax.f32 %v326, 0.0
    %v381 = vmax.f32 %v331, 0.0
    %v382 = vmax.f32 %v334, 0.0
    %v383 = vmax.f32 %v339, 0.0
    %v384 = vmax.f32 %v342, 0.0
    %v385 = vmax.f32 %v347, 0.0
    %v386 = vmax.f32 %v350, 0.0
    %v387 = vmax.f32 %v355, 0.0
    %v388 = vmax.f32 %v358, 0.0
    %v389 = vmax.f32 %v363, 0.0
    %v390 = vmax.f32 %v366, 0.0
    %v391 = vmax.f32 %v371, 0.0
    %v392 = vmax.f32 %v374, 0.0
    %v393 = vpack.c.bf16 %v378, %v377
    %v394 = vpack.c.bf16 %v380, %v379
    %v395 = vpack.c.bf16 %v382, %v381
    %v396 = vpack.c.bf16 %v384, %v383
    %v397 = vpack.c.bf16 %v386, %v385
    %v398 = vpack.c.bf16 %v388, %v387
    %v399 = vpack.c.bf16 %v390, %v389
    %v400 = vpack.c.bf16 %v392, %v391
    %v401 = vld [vmem:[%s5] sm:$0xf]
    %v402 = vld [vmem:[%s5 + $0x4] sm:$0xf]
    %v403 = vld [vmem:[%s5 + $0x8] sm:$0xf]
    %v404 = vld [vmem:[%s5 + $0xc] sm:$0xf]
    %v405 = vld [vmem:[%s5 + $0x10] sm:$0xf]
    %v406 = vld [vmem:[%s5 + $0x14] sm:$0xf]
    %v407 = vld [vmem:[%s5 + $0x18] sm:$0xf]
    %v408 = vld [vmem:[%s5 + $0x1c] sm:$0xf]
    %v409 = vld [vmem:[%s5 + $0x20] sm:$0xf]
    %v410 = vld [vmem:[%s5 + $0x24] sm:$0xf]
    %v411 = vld [vmem:[%s5 + $0x28] sm:$0xf]
    %v412 = vld [vmem:[%s5 + $0x2c] sm:$0xf]
    %v413 = vld [vmem:[%s5 + $0x30] sm:$0xf]
    %v414 = vld [vmem:[%s5 + $0x34] sm:$0xf]
    %v415 = vld [vmem:[%s5 + $0x38] sm:$0xf]
    %v416 = vld [vmem:[%s5 + $0x3c] sm:$0xf]
    %v417 = vld [vmem:[%s6] sm:$0x1]
    %v419 = vlaneseq
    %v420 = vshrl.u32 %v419, 7
    %v421 = vsub.s32 0, %v420
    %v422 = vrot.slane %v417, %v421
    %v440 = vunpack.c.l.b16 %v401
    %v441 = vunpack.c.l.b16 %v402
    %v442 = vunpack.c.l.b16 %v403
    %v443 = vunpack.c.l.b16 %v404
    %v444 = vunpack.c.l.b16 %v405
    %v445 = vunpack.c.l.b16 %v406
    %v446 = vunpack.c.l.b16 %v407
    %v447 = vunpack.c.l.b16 %v408
    %v448 = vunpack.c.l.b16 %v409
    %v449 = vunpack.c.l.b16 %v410
    %v450 = vunpack.c.l.b16 %v411
    %v451 = vunpack.c.l.b16 %v412
    %v452 = vunpack.c.l.b16 %v413
    %v453 = vunpack.c.l.b16 %v414
    %v454 = vunpack.c.l.b16 %v415
    %v455 = vunpack.c.l.b16 %v416
    %v456 = vpack.c.b16 %v441, %v440
    %v457 = vpack.c.b16 %v443, %v442
    %v458 = vpack.c.b16 %v445, %v444
    %v459 = vpack.c.b16 %v447, %v446
    %v460 = vpack.c.b16 %v449, %v448
    %v461 = vpack.c.b16 %v451, %v450
    %v462 = vpack.c.b16 %v453, %v452
    %v463 = vpack.c.b16 %v455, %v454
    %472 = vmatprep.subr.bf16.mxu0 0
    %473 = vmatpush1.bf16.msra.mxu0 %v456
    %474 = vmatprep.subr.bf16.mxu0 0
    %475 = vmatpush1.bf16.msra.mxu0 %v457
    %476 = vmatprep.subr.bf16.mxu0 0
    %477 = vmatpush1.bf16.msra.mxu0 %v458
    %478 = vmatprep.subr.bf16.mxu0 0
    %479 = vmatpush1.bf16.msra.mxu0 %v459
    %480 = vmatprep.subr.bf16.mxu0 0
    %481 = vmatpush1.bf16.msra.mxu0 %v460
    %482 = vmatprep.subr.bf16.mxu0 0
    %483 = vmatpush1.bf16.msra.mxu0 %v461
    %484 = vmatprep.subr.bf16.mxu0 0
    %485 = vmatpush1.bf16.msra.mxu0 %v462
    %486 = vmatprep.subr.bf16.mxu0 0
    %487 = vmatpush1.bf16.msra.mxu0 %v463
    %488 = vmatprep.subr.bf16.mxu0 0
    %489 = vmatpush1.bf16.msra.mxu0 0
    %490 = vmatprep.subr.bf16.mxu0 0
    %491 = vmatpush1.bf16.msra.mxu0 0
    %492 = vmatprep.subr.bf16.mxu0 0
    %493 = vmatpush1.bf16.msra.mxu0 0
    %494 = vmatprep.subr.bf16.mxu0 0
    %495 = vmatpush1.bf16.msra.mxu0 0
    %496 = vmatprep.subr.bf16.mxu0 0
    %497 = vmatpush1.bf16.msra.mxu0 0
    %498 = vmatprep.subr.bf16.mxu0 0
    %499 = vmatpush1.bf16.msra.mxu0 0
    %500 = vmatprep.subr.bf16.mxu0 0
    %501 = vmatpush1.bf16.msra.mxu0 0
    %502 = vmatprep.subr.bf16.mxu0 0
    %503 = vmatpush1.bf16.msra.mxu0 0
    %504 = vmatprep.mubr.bf16.mxu0 0
    %505 = vmatmul.mubr.bf16.gmra.mrb[0].mxu0 %v393
    %v506 = vpop.f32.mrb[0].mxu0
    %v507 = vadd.f32 %v422, %v506
    %v508 = vpop.f32.mrb[0].mxu0
    %v509 = vpop.f32.mrb[0].mxu0
    %v510 = vadd.f32 %v422, %v509
    %v511 = vpop.f32.mrb[0].mxu0
    %512 = vmatprep.mubr.bf16.mxu0 0
    %513 = vmatmul.mubr.bf16.gmra.mrb[0].mxu0 %v394
    %v514 = vpop.f32.mrb[0].mxu0
    %v515 = vadd.f32 %v422, %v514
    %v516 = vpop.f32.mrb[0].mxu0
    %v517 = vpop.f32.mrb[0].mxu0
    %v518 = vadd.f32 %v422, %v517
    %v519 = vpop.f32.mrb[0].mxu0
    %520 = vmatprep.mubr.bf16.mxu0 0
    %521 = vmatmul.mubr.bf16.gmra.mrb[0].mxu0 %v395
    %v522 = vpop.f32.mrb[0].mxu0
    %v523 = vadd.f32 %v422, %v522
    %v524 = vpop.f32.mrb[0].mxu0
    %v525 = vpop.f32.mrb[0].mxu0
    %v526 = vadd.f32 %v422, %v525
    %v527 = vpop.f32.mrb[0].mxu0
    %528 = vmatprep.mubr.bf16.mxu0 0
    %529 = vmatmul.mubr.bf16.gmra.mrb[0].mxu0 %v396
    %v530 = vpop.f32.mrb[0].mxu0
    %v531 = vadd.f32 %v422, %v530
    %v532 = vpop.f32.mrb[0].mxu0
    %v533 = vpop.f32.mrb[0].mxu0
    %v534 = vadd.f32 %v422, %v533
    %v535 = vpop.f32.mrb[0].mxu0
    %536 = vmatprep.mubr.bf16.mxu0 0
    %537 = vmatmul.mubr.bf16.gmra.mrb[0].mxu0 %v397
    %v538 = vpop.f32.mrb[0].mxu0
    %v539 = vadd.f32 %v422, %v538
    %v540 = vpop.f32.mrb[0].mxu0
    %v541 = vpop.f32.mrb[0].mxu0
    %v542 = vadd.f32 %v422, %v541
    %v543 = vpop.f32.mrb[0].mxu0
    %544 = vmatprep.mubr.bf16.mxu0 0
    %545 = vmatmul.mubr.bf16.gmra.mrb[0].mxu0 %v398
    %v546 = vpop.f32.mrb[0].mxu0
    %v547 = vadd.f32 %v422, %v546
    %v548 = vpop.f32.mrb[0].mxu0
    %v549 = vpop.f32.mrb[0].mxu0
    %v550 = vadd.f32 %v422, %v549
    %v551 = vpop.f32.mrb[0].mxu0
    %552 = vmatprep.mubr.bf16.mxu0 0
    %553 = vmatmul.mubr.bf16.gmra.mrb[0].mxu0 %v399
    %v554 = vpop.f32.mrb[0].mxu0
    %v555 = vadd.f32 %v422, %v554
    %v556 = vpop.f32.mrb[0].mxu0
    %v557 = vpop.f32.mrb[0].mxu0
    %v558 = vadd.f32 %v422, %v557
    %v559 = vpop.f32.mrb[0].mxu0
    %560 = vmatprep.mubr.bf16.mxu0 0
    %561 = vmatmul.mubr.bf16.gmra.mrb[0].mxu0 %v400
    %v562 = vpop.f32.mrb[0].mxu0
    %v563 = vadd.f32 %v422, %v562
    %v564 = vpop.f32.mrb[0].mxu0
    %v565 = vpop.f32.mrb[0].mxu0
    %v566 = vadd.f32 %v422, %v565
    %v567 = vpop.f32.mrb[0].mxu0
    %568 = vdwg.mxu0
    %vm569 = vcmask 31744
    %570 = vst.msk [vmem:[#allocation2] sm:$0xff] %vm569, %v507
    %571 = vst.msk [vmem:[#allocation2 + $0x8] sm:$0xff] %vm569, %v510
    %572 = vst.msk [vmem:[#allocation2 + $0x10] sm:$0xff] %vm569, %v515
    %573 = vst.msk [vmem:[#allocation2 + $0x18] sm:$0xff] %vm569, %v518
    %574 = vst.msk [vmem:[#allocation2 + $0x20] sm:$0xff] %vm569, %v523
    %575 = vst.msk [vmem:[#allocation2 + $0x28] sm:$0xff] %vm569, %v526
    %576 = vst.msk [vmem:[#allocation2 + $0x30] sm:$0xff] %vm569, %v531
    %577 = vst.msk [vmem:[#allocation2 + $0x38] sm:$0xff] %vm569, %v534
    %578 = vst.msk [vmem:[#allocation2 + $0x40] sm:$0xff] %vm569, %v539
    %579 = vst.msk [vmem:[#allocation2 + $0x48] sm:$0xff] %vm569, %v542
    %580 = vst.msk [vmem:[#allocation2 + $0x50] sm:$0xff] %vm569, %v547
    %581 = vst.msk [vmem:[#allocation2 + $0x58] sm:$0xff] %vm569, %v550
    %582 = vst.msk [vmem:[#allocation2 + $0x60] sm:$0xff] %vm569, %v555
    %583 = vst.msk [vmem:[#allocation2 + $0x68] sm:$0xff] %vm569, %v558
    %584 = vst.msk [vmem:[#allocation2 + $0x70] sm:$0xff] %vm569, %v563
    %585 = vst.msk [vmem:[#allocation2 + $0x78] sm:$0xff] %vm569, %v566
    // Predicated region
    $region30: #{tpu_custom_call.1} parent=1 // pred_check
      _
    $region31: #{tpu_custom_call.1} parent=1 // pred_check_branch
      %587 = sbr.rel (0) target = $region33
    $region32: #{tpu_custom_call.1} parent=1 // pred_region
      // Predicated region
      $region34: #{tpu_custom_call.1} parent=32 // pred_check
        _
      $region35: #{tpu_custom_call.1} parent=32 // pred_check_branch
        %589 = sbr.rel (0) target = $region37
      $region36: #{tpu_custom_call.1} parent=32 // pred_region
        // Predicated region
        $region38: #{tpu_custom_call.1} parent=36 // pred_check
          _
        $region39: #{tpu_custom_call.1} parent=36 // pred_check_branch
          %591 = sbr.rel (0) target = $region41
        $region40: #{tpu_custom_call.1} parent=36 // pred_region
          // Predicated region
          $region53: #{tpu_custom_call.1} parent=40 // pred_check
            _
          $region54: #{tpu_custom_call.1} parent=40 // pred_check_branch
            %606 = sbr.rel (0) target = $region56
          $region55: #{tpu_custom_call.1} parent=40 // pred_region
            loop: start=0, step=1, limit=1
            $region57: #{tpu_custom_call.1} parent=55 // loop_pre_header
              _
            $region58: #{tpu_custom_call.1} parent=55 // loop_header
              %s608 = sphi 0, %s612
              %p609 = scmp.ge.s32.totalorder %s608, 1
              %s613 = sphi [#allocation2], [#allocation2]
              %s614 = sphi %s7, %s7
            $region59: #{tpu_custom_call.1} parent=55 // loop_header_branch
              %611 = sbr.rel (%p609) target = $region63
            $region60: #{tpu_custom_call.1} parent=55 // loop_body
              %v615 = vld [vmem:[%s613] sm:$0xff]
              %616 = vst [vmem:[%s614] sm:$0xff] %v615
            $region61: #{tpu_custom_call.1} parent=55 // loop_footer
              %s612 = sadd.s32 1, %s608
            $region62: #{tpu_custom_call.1} parent=55 // loop_footer_branch
              %607 = sbr.rel target = $region58
            $region63: #{tpu_custom_call.1} parent=55 // loop_exit
              _
          $region56: #{tpu_custom_call.1} parent=40 // pred_fallthru
            _
          // Predicated region
          $region64: #{tpu_custom_call.1} parent=40 // pred_check
            _
          $region65: #{tpu_custom_call.1} parent=40 // pred_check_branch
            %618 = sbr.rel target = $region67
          $region66: #{tpu_custom_call.1} parent=40 // pred_region
            _
          $region67: #{tpu_custom_call.1} parent=40 // pred_fallthru
            _
        $region41: #{tpu_custom_call.1} parent=36 // pred_fallthru
          _
        // Predicated region
        $region42: #{tpu_custom_call.1} parent=36 // pred_check
          _
        $region43: #{tpu_custom_call.1} parent=36 // pred_check_branch
          %593 = sbr.rel target = $region45
        $region44: #{tpu_custom_call.1} parent=36 // pred_region
          loop: start=0, step=1, limit=1
          $region46: #{tpu_custom_call.1} parent=44 // loop_pre_header
            _
          $region47: #{tpu_custom_call.1} parent=44 // loop_header
            %s596 = sphi 0, %s600
            %p597 = scmp.ge.s32.totalorder %s596, 1
            %s601 = sphi [#allocation2], [#allocation2]
            %s602 = sphi %s7, %s7
          $region48: #{tpu_custom_call.1} parent=44 // loop_header_branch
            %599 = sbr.rel (%p597) target = $region52
          $region49: #{tpu_custom_call.1} parent=44 // loop_body
            %v603 = vld [vmem:[%s601] sm:$0xff]
            %604 = vst [vmem:[%s602] sm:$0xff] %v603
          $region50: #{tpu_custom_call.1} parent=44 // loop_footer
            %s600 = sadd.s32 1, %s596
          $region51: #{tpu_custom_call.1} parent=44 // loop_footer_branch
            %595 = sbr.rel target = $region47
          $region52: #{tpu_custom_call.1} parent=44 // loop_exit
            _
        $region45: #{tpu_custom_call.1} parent=36 // pred_fallthru
          _
      $region37: #{tpu_custom_call.1} parent=32 // pred_fallthru
        _
      %619 = vnop
    $region33: #{tpu_custom_call.1} parent=1 // pred_fallthru
      _
    // Predicated region
    $region68: #{tpu_custom_call.1} parent=1 // pred_check
      _
    $region69: #{tpu_custom_call.1} parent=1 // pred_check_branch
      %621 = sbr.rel (0) target = $region71
    $region70: #{tpu_custom_call.1} parent=1 // pred_region
      _
    $region71: #{tpu_custom_call.1} parent=1 // pred_fallthru
      _

</llo_original>
